<compile_context>
chip_gen: v5e
topology: v5e:2x2
jax: 0.10.0
libtpu: 0.0.40
codegen_flags: <defaults>
</compile_context>

<pallas_src>
import jax
import jax.numpy as jnp
from jax import lax
from jax.experimental import pallas as pl
from jax.experimental.pallas import tpu as pltpu

_LANE = 128                          # lane width: last-dim tiles are multiples of 128
_VMEM_LIMIT = 48 * 1024 * 1024       # < v7x 64 MiB physical; plenty on v5e/v6e

# Preferred tiles: ~4.5 MiB double-buffered f32 footprint -> fits all generations.
_TM_PREF = 256
_TN_PREF = 512
_TK_PREF = 512


def _round_up(x: int, m: int) -> int:
    return ((x + m - 1) // m) * m


def _sublane(dtype) -> int:
    # Minimum sublane multiple: 8 for 32-bit, 16 for bf16, 32 for 8-bit.
    bits = jnp.dtype(dtype).itemsize * 8
    return max(8, 256 // bits)


def _contract_k(x_tile, w_tile):
    # x_tile: (tm, tk), w_tile: (tn, tk) -> (tm, tn); contract K on both last
    # dims so W never needs a wrapper-side transpose.
    return lax.dot_general(
        x_tile, w_tile,
        dimension_numbers=(((1,), (1,)), ((), ())),
        preferred_element_type=jnp.float32,
    )


def _matmul_kernel_acc(x_ref, w_ref, o_ref, acc_ref):
    """K is tiled: accumulate partial products in f32 VMEM scratch."""
    @pl.when(pl.program_id(2) == 0)
    def _():
        acc_ref[...] = jnp.zeros_like(acc_ref)

    acc_ref[...] += _contract_k(x_ref[...], w_ref[...])

    @pl.when(pl.program_id(2) == pl.num_programs(2) - 1)
    def _():
        o_ref[...] = acc_ref[...].astype(o_ref.dtype)


def _matmul_kernel_single(x_ref, w_ref, o_ref):
    """K fits in one tile: write straight to the output block (no scratch)."""
    o_ref[...] = _contract_k(x_ref[...], w_ref[...]).astype(o_ref.dtype)


@jax.jit
def linear_forward(x: jax.Array, W: jax.Array) -> jax.Array:
    """y = x @ W.T  with x: (..., in_features), W: (out_features, in_features)."""
    *lead, K = x.shape
    N, K_w = W.shape
    assert K == K_w, f"in_features mismatch: {K} vs {K_w}"

    if W.dtype != x.dtype:
        W = W.astype(x.dtype)
    out_dtype = x.dtype

    M = 1
    for d in lead:
        M *= d
    x2 = x.reshape(M, K)

    # Tile selection: prefer big lane-dense tiles, cap at the (aligned) dim.
    sub = _sublane(x.dtype)
    tm = min(_TM_PREF, _round_up(M, sub))
    tn = min(_TN_PREF, _round_up(N, _LANE))
    tk = min(_TK_PREF, _round_up(K, _LANE))

    Mp = _round_up(M, tm)
    Np = _round_up(N, tn)
    Kp = _round_up(K, tk)

    # Zero-pad ragged edges. K-padding must be zero for correctness; M/N
    # padding is sliced off below. No-op when shapes already divide the tiles.
    if (Mp, Kp) != (M, K):
        x2 = jnp.pad(x2, ((0, Mp - M), (0, Kp - K)))
    Wp = W
    if (Np, Kp) != (N, K):
        Wp = jnp.pad(W, ((0, Np - N), (0, Kp - K)))

    mt, nt, kt = Mp // tm, Np // tn, Kp // tk

    itm = jnp.dtype(x.dtype).itemsize
    cost = pl.CostEstimate(
        flops=2 * Mp * Np * Kp,
        transcendentals=0,
        bytes_accessed=(Mp * Kp + Np * Kp) * itm
        + Mp * Np * jnp.dtype(out_dtype).itemsize,
    )

    if kt == 1:
        kernel = _matmul_kernel_single
        grid_spec = pltpu.PrefetchScalarGridSpec(
            num_scalar_prefetch=0,
            grid=(mt, nt),
            in_specs=[
                pl.BlockSpec((tm, tk), lambda i, j: (i, 0)),
                pl.BlockSpec((tn, tk), lambda i, j: (j, 0)),  # W stays (N, K)
            ],
            out_specs=pl.BlockSpec((tm, tn), lambda i, j: (i, j)),
        )
        dims = ("parallel", "parallel")
    else:
        kernel = _matmul_kernel_acc
        grid_spec = pltpu.PrefetchScalarGridSpec(
            num_scalar_prefetch=0,
            grid=(mt, nt, kt),
            in_specs=[
                pl.BlockSpec((tm, tk), lambda i, j, k: (i, k)),
                pl.BlockSpec((tn, tk), lambda i, j, k: (j, k)),  # W stays (N, K)
            ],
            out_specs=pl.BlockSpec((tm, tn), lambda i, j, k: (i, j)),
            scratch_shapes=[pltpu.VMEM((tm, tn), jnp.float32)],
        )
        dims = ("parallel", "parallel", "arbitrary")

    out = pl.pallas_call(
        kernel,
        out_shape=jax.ShapeDtypeStruct((Mp, Np), out_dtype),
        grid_spec=grid_spec,
        compiler_params=pltpu.CompilerParams(
            dimension_semantics=dims,
            vmem_limit_bytes=_VMEM_LIMIT,
        ),
        cost_estimate=cost,
    )(x2, Wp)

    if (Mp, Np) != (M, N):
        out = out[:M, :N]
    return out.reshape(*lead, N)


def init_linear_weight(key, in_features: int, out_features: int,
                       dtype=jnp.float32) -> jax.Array:
    """Matches torch.nn.init.trunc_normal_(W, mean=0, std=2/(out+in), a=-2, b=2)."""
    std = 2.0 / (out_features + in_features)
    # torch truncates at absolute values [-2, 2]; jax truncated_normal truncates
    # a standard normal, so scale the bounds by 1/std and multiply back.
    lo, hi = -2.0 / std, 2.0 / std
    w = jax.random.truncated_normal(
        key, lo, hi, shape=(out_features, in_features), dtype=jnp.float32
    ) * std
    return w.astype(dtype)


if __name__ == "__main__":
    key = jax.random.PRNGKey(0)
    k_w, k_x = jax.random.split(key)

    batch, seq, in_features, out_features = 2, 8, 32, 64

    W = init_linear_weight(k_w, in_features, out_features)              # (64, 32)
    x = jax.random.normal(k_x, (batch, seq, in_features), jnp.float32)  # (2, 8, 32)

    y = linear_forward(x, W)
    y = jax.block_until_ready(y)

    # Sanity check against plain-JAX reference.
    y_ref = x @ W.T
    assert y.shape == (batch, seq, out_features), y.shape
    assert jnp.allclose(y, y_ref, atol=1e-5, rtol=1e-5), "mismatch vs reference"

    print("KERNEL_OK")
</pallas_src>

<mosaic_0001>
module attributes {stable_mosaic.version = 11 : i64} {
  func.func @_matmul_kernel_single(%arg0: i32, %arg1: i32, %arg2: memref<16x128xf32, #tpu.memory_space<vmem>>, %arg3: memref<128x128xf32, #tpu.memory_space<vmem>>, %arg4: memref<16x128xf32, #tpu.memory_space<vmem>>) attributes {dimension_semantics = [#tpu.dimension_semantics<parallel>, #tpu.dimension_semantics<parallel>], iteration_bounds = array<i64: 1, 1>, scalar_prefetch = 0 : i64, scratch_operands = 0 : i64, tpu.core_type = #tpu.core_type<tc>, window_params = [{transform_indices = @transform_0, window_bounds = array<i64: 16, 128>}, {transform_indices = @transform_1, window_bounds = array<i64: 128, 128>}, {transform_indices = @transform_2, window_bounds = array<i64: 16, 128>}]} {
    %c0 = arith.constant 0 : index
    %c0_0 = arith.constant 0 : index
    %0 = vector.load %arg2[%c0, %c0_0] : memref<16x128xf32, #tpu.memory_space<vmem>>, vector<16x128xf32>
    %c0_1 = arith.constant 0 : index
    %c0_2 = arith.constant 0 : index
    %1 = vector.load %arg3[%c0_1, %c0_2] : memref<128x128xf32, #tpu.memory_space<vmem>>, vector<128x128xf32>
    %cst = arith.constant dense<0.000000e+00> : vector<16x128xf32>
    %2 = tpu.matmul %0, %1, %cst {dimension_numbers = #tpu.dot_dimension_numbers<[1], [1], [0], [0], [0, 0, 1, 0], [], []>} : vector<16x128xf32>, vector<128x128xf32>, vector<16x128xf32> -> vector<16x128xf32>
    %c0_3 = arith.constant 0 : index
    %c0_4 = arith.constant 0 : index
    %3 = vector.load %arg4[%c0_3, %c0_4] : memref<16x128xf32, #tpu.memory_space<vmem>>, vector<16x128xf32>
    tpu.vector_store %arg4[%c0_3, %c0_4], %2 {strides = array<i32>} : memref<16x128xf32, #tpu.memory_space<vmem>>, vector<16x128xf32>,
    return
  }
  func.func @transform_0(%arg0: i32, %arg1: i32) -> (i32, i32) {
    %c0_i32 = arith.constant 0 : i32
    %c0_i32_0 = arith.constant 0 : i32
    return %arg0, %c0_i32 : i32, i32
  }
  func.func @transform_1(%arg0: i32, %arg1: i32) -> (i32, i32) {
    %c0_i32 = arith.constant 0 : i32
    %c0_i32_0 = arith.constant 0 : i32
    return %arg1, %c0_i32 : i32, i32
  }
  func.func @transform_2(%arg0: i32, %arg1: i32) -> (i32, i32) {
    %c0_i32 = arith.constant 0 : i32
    return %arg0, %arg1 : i32, i32
  }
}

</mosaic_0001>

<llo_original>
// kernel: linear_forward.1
$region0: #{linear_forward.1}
  #allocation0 [shape = 'u32[]', space=smem, size = 0x4, offset = 0x4, fixed_abs, tag = 'smem constant byte address 0x4 - core index']
  #allocation1 [shape = 'u32[72,128]{1,0:T(1,128)}', space=vmem, size = 0x9000, scoped, tag = 'internal scratch']
  %s0 = inlined_call_operand.vmem [shape: f32[16,128], index: 0, kind: input, shape index: {}]
  %s1 = inlined_call_operand.vmem [shape: f32[128,128], index: 1, kind: input, shape index: {}]
  %s2 = inlined_call_operand.vmem [shape: f32[16,128], index: 2, kind: output, shape index: {}]
  %s3 = sld [smem:[#allocation0]]
  $region18: #{linear_forward.1} parent=0
    _
  %s5 = ssub.s32 1, %s3
  %s6 = scalar_select 0, %s5, %s3
  // Predicated region
  $region2: #{linear_forward.1} parent=0 // pred_check
    _
  $region3: #{linear_forward.1} parent=0 // pred_check_branch
    %8 = sbr.rel (0) target = $region5
  $region4: #{linear_forward.1} parent=0 // pred_region
    _
  $region5: #{linear_forward.1} parent=0 // pred_fallthru
    _
  // Predicated region
  $region6: #{linear_forward.1} parent=0 // pred_check
    _
  $region7: #{linear_forward.1} parent=0 // pred_check_branch
    %10 = sbr.rel (0) target = $region9
  $region8: #{linear_forward.1} parent=0 // pred_region
    _
  $region9: #{linear_forward.1} parent=0 // pred_fallthru
    _
  %v11 = vld [vmem:[%s0] sm:$0xff]
  %v12 = vld [vmem:[%s0 + $0x8] sm:$0xff]
  %v13 = vld [vmem:[%s1] sm:$0xff]
  %v14 = vld [vmem:[%s1 + $0x8] sm:$0xff]
  %v15 = vld [vmem:[%s1 + $0x10] sm:$0xff]
  %v16 = vld [vmem:[%s1 + $0x18] sm:$0xff]
  %v17 = vld [vmem:[%s1 + $0x20] sm:$0xff]
  %v18 = vld [vmem:[%s1 + $0x28] sm:$0xff]
  %v19 = vld [vmem:[%s1 + $0x30] sm:$0xff]
  %v20 = vld [vmem:[%s1 + $0x38] sm:$0xff]
  %v21 = vld [vmem:[%s1 + $0x40] sm:$0xff]
  %v22 = vld [vmem:[%s1 + $0x48] sm:$0xff]
  %v23 = vld [vmem:[%s1 + $0x50] sm:$0xff]
  %v24 = vld [vmem:[%s1 + $0x58] sm:$0xff]
  %v25 = vld [vmem:[%s1 + $0x60] sm:$0xff]
  %v26 = vld [vmem:[%s1 + $0x68] sm:$0xff]
  %v27 = vld [vmem:[%s1 + $0x70] sm:$0xff]
  %v28 = vld [vmem:[%s1 + $0x78] sm:$0xff]
  %29 = vmatpush.xpose.msra.mxu0 %v28
  %30 = vmatpush.xpose.msra.mxu0 %v27
  %31 = vmatpush.xpose.msra.mxu0 %v26
  %32 = vmatpush.xpose.msra.mxu0 %v25
  %33 = vmatpush.xpose.msra.mxu0 %v24
  %34 = vmatpush.xpose.msra.mxu0 %v23
  %35 = vmatpush.xpose.msra.mxu0 %v22
  %36 = vmatpush.xpose.msra.mxu0 %v21
  %37 = vmatpush.xpose.msra.mxu0 %v20
  %38 = vmatpush.xpose.msra.mxu0 %v19
  %39 = vmatpush.xpose.msra.mxu0 %v18
  %40 = vmatpush.xpose.msra.mxu0 %v17
  %41 = vmatpush.xpose.msra.mxu0 %v16
  %42 = vmatpush.xpose.msra.mxu0 %v15
  %43 = vmatpush.xpose.msra.mxu0 %v14
  %44 = vmatpush.xpose.msra.mxu0 %v13
  %45 = vmatmul.f32.gmra.mxu0 %v11
  %v46 = vpop.f32.mrf.mxu0
  %v47 = vadd.f32 0.0, %v46
  %48 = vmatmul.f32.gmra.mxu0 %v12
  %v49 = vpop.f32.mrf.mxu0
  %v50 = vadd.f32 0.0, %v49
  %51 = vdwg.mxu0
  %52 = vst [vmem:[%s2] sm:$0xff] %v47
  %53 = vst [vmem:[%s2 + $0x8] sm:$0xff] %v50
  // Predicated region
  $region10: #{linear_forward.1} parent=0 // pred_check
    _
  $region11: #{linear_forward.1} parent=0 // pred_check_branch
    %55 = sbr.rel (0) target = $region13
  $region12: #{linear_forward.1} parent=0 // pred_region
    _
  $region13: #{linear_forward.1} parent=0 // pred_fallthru
    _
  // Predicated region
  $region14: #{linear_forward.1} parent=0 // pred_check
    _
  $region15: #{linear_forward.1} parent=0 // pred_check_branch
    %57 = sbr.rel (0) target = $region17
  $region16: #{linear_forward.1} parent=0 // pred_region
    _
  $region17: #{linear_forward.1} parent=0 // pred_fallthru
    _

</llo_original>
